<compile_context>
chip_gen: v7x
topology: tpu7x:2x2x1
jax: 0.10.0
libtpu: 0.0.40
codegen_flags: <defaults>
</compile_context>

<pallas_src>
import math

import numpy as np
import jax
import jax.numpy as jnp
from jax.experimental import pallas as pl
from jax.experimental.pallas import tpu as pltpu


def _round_up(x, m):
    return ((x + m - 1) // m) * m


def _tpu_kind():
    try:
        return jax.devices()[0].device_kind.lower()
    except Exception:
        return ""


def _make_selfsup_kernel(n_enc, n_dec, c_dim):
    """Fused encoder -> reparameterize -> decoder kernel for a fixed layer count."""
    n_param_refs = 2 * (n_enc + n_dec)

    def kernel(x_ref, eps_ref, *refs):
        param_refs = refs[:n_param_refs]
        packed_ref = refs[n_param_refs]        # (TB, 3*c_dim): mu_c | log_var_c | c
        mu_x_ref = refs[n_param_refs + 1]      # (TB, x_dim)

        enc = [(param_refs[2 * i], param_refs[2 * i + 1]) for i in range(n_enc)]
        dec = [(param_refs[2 * (n_enc + i)], param_refs[2 * (n_enc + i) + 1])
               for i in range(n_dec)]

        # ---- Encoder MLP: Linear -> ReLU -> ... -> Linear ----
        h = x_ref[...]
        for i, (w, b) in enumerate(enc):
            # MXU matmul: operands in compute dtype, f32 accumulate; biases stay f32.
            h = jnp.dot(h.astype(w.dtype), w[...],
                        preferred_element_type=jnp.float32) + b[...]
            if i != n_enc - 1:
                h = jnp.maximum(h, 0.0)

        # Split enc_out (TB, 2*c_dim) into (mu_c, log_var_c); reparameterize (EUP exp).
        mu_c = h[:, :c_dim]
        log_var_c = h[:, c_dim:2 * c_dim]
        c = mu_c + eps_ref[...].astype(jnp.float32) * jnp.exp(0.5 * log_var_c)

        # Single packed store for the three small tensors.
        packed_ref[...] = jnp.concatenate([h[:, :2 * c_dim], c],
                                          axis=-1).astype(packed_ref.dtype)

        # ---- Decoder MLP: Linear -> ReLU -> ... -> Linear, then sigmoid ----
        g = c
        for i, (w, b) in enumerate(dec):
            g = jnp.dot(g.astype(w.dtype), w[...],
                        preferred_element_type=jnp.float32) + b[...]
            if i != n_dec - 1:
                g = jnp.maximum(g, 0.0)
        # sigmoid(x) == 0.5*tanh(0.5*x) + 0.5 : one transcendental instead of exp+recip.
        mu_x_ref[...] = (0.5 * jnp.tanh(0.5 * g) + 0.5).astype(mu_x_ref.dtype)

    return kernel


def selfsup_forward(x, eps, enc_params, dec_params, log_var_x=0.0,
                    compute_dtype=jnp.float32, mu_x_dtype=None, batch_tile=None):
    """Fused SelfSup forward.

    x:   (N, x_dim)   -- supply bf16 x from the producer to halve the input stream
                         (MXU is bf16-native on v5e/v6e/v7x; accumulation stays f32).
    eps: (N, c_dim)   reparameterization noise.
    enc_params / dec_params: lists of (W, b), W:(in,out), b:(1,out).
    compute_dtype: matmul operand / weight dtype (f32 default; bf16 is a bandwidth lever).
    mu_x_dtype:    dtype of the mu_x output (default: x.dtype; bf16 halves the largest
                   write stream on v6e/v7x).
    Returns ((mu_c, log_var_c), (mu_x, log_var_x), c) matching the torch module.
    """
    N, x_dim = x.shape
    c_dim = eps.shape[1]
    n_enc, n_dec = len(enc_params), len(dec_params)
    if mu_x_dtype is None:
        mu_x_dtype = x.dtype

    # Weights in compute dtype (halves weight bytes when bf16); biases stay f32.
    flat_params = []
    for (w, b) in enc_params + dec_params:
        flat_params.append(w.astype(compute_dtype))
        flat_params.append(b.astype(jnp.float32))
    p_bytes = sum(int(p.size) * p.dtype.itemsize for p in flat_params)

    # ---- generation-aware tile cap and VMEM budget ----
    kind = _tpu_kind()
    if "v7" in kind:
        tb_cap, vmem_cap = (batch_tile or 4096), (48 << 20)   # 64 MiB physical/TC: headroom
    elif "v5" in kind or "v6" in kind:
        tb_cap, vmem_cap = (batch_tile or 8192), (96 << 20)   # 128 MiB physical
    else:  # unknown -> conservative (works on every generation)
        tb_cap, vmem_cap = (batch_tile or 4096), (48 << 20)

    in_bytes = np.dtype(x.dtype).itemsize
    out_bytes = np.dtype(mu_x_dtype).itemsize
    layer_dims = [(w.shape[0], w.shape[1]) for (w, _) in enc_params + dec_params]
    max_width = max([x_dim] + [o for _, o in layer_dims])
    # Per-row VMEM: double-buffered in/out streams + generous f32 activation live set.
    per_row = (2 * (x_dim * in_bytes + c_dim * 4 + 3 * c_dim * 4 + x_dim * out_bytes)
               + 4 * max_width * 4)
    headroom = 6 << 20
    tb_fit = max(8, (((vmem_cap - 2 * p_bytes - headroom) // per_row) // 8) * 8)
    tb_cap = min(tb_cap, tb_fit)

    # ---- batch tile: full-extent block for tiny N; else >=~4 grid steps so v7x's two
    # TensorCores both get work and the pipeline has overlap. No padding / slicing. ----
    if N <= 512:
        tb = N                                   # full-extent block: always layout-legal
    else:
        tb = max(8, min(tb_cap, _round_up(pl.cdiv(N, 4), 8)))
    grid = (pl.cdiv(N, tb),)

    in_specs = [
        pl.BlockSpec((tb, x_dim), lambda i: (i, 0)),      # x tile, streamed
        pl.BlockSpec((tb, c_dim), lambda i: (i, 0)),      # eps tile, streamed
    ] + [
        # weights/biases: constant index_map -> VMEM-resident across grid steps.
        pl.BlockSpec(p.shape, lambda i: (0, 0)) for p in flat_params
    ]
    out_shapes = (
        jax.ShapeDtypeStruct((N, 3 * c_dim), jnp.float32),   # mu_c | log_var_c | c
        jax.ShapeDtypeStruct((N, x_dim), mu_x_dtype),        # mu_x
    )
    out_specs = (
        pl.BlockSpec((tb, 3 * c_dim), lambda i: (i, 0)),
        pl.BlockSpec((tb, x_dim), lambda i: (i, 0)),
    )

    # ---- advisory cost estimate for the XLA scheduler ----
    flops = 2 * N * sum(i * o for i, o in layer_dims)
    transcendentals = N * (c_dim + x_dim)        # exp(0.5*logvar) + tanh-sigmoid
    io_bytes = (N * x_dim * in_bytes + N * c_dim * 4
                + N * 3 * c_dim * 4 + N * x_dim * out_bytes)
    cost = pl.CostEstimate(flops=int(flops),
                           transcendentals=int(transcendentals),
                           bytes_accessed=int(io_bytes + p_bytes))

    # VMEM limit: actual double-buffered streams + params + headroom (no double counting).
    vmem_limit = int(min(vmem_cap, max(32 << 20, tb * per_row + 2 * p_bytes + headroom)))

    kernel = _make_selfsup_kernel(n_enc, n_dec, c_dim)
    packed, mu_x = pl.pallas_call(
        kernel,
        grid=grid,
        in_specs=in_specs,
        out_specs=out_specs,
        out_shape=out_shapes,
        cost_estimate=cost,
        compiler_params=pltpu.CompilerParams(
            dimension_semantics=("parallel",),   # v7x: shard batch grid over 2 TCs
            vmem_limit_bytes=vmem_limit,
        ),
    )(x, eps, *flat_params)

    mu_c = packed[:, :c_dim]
    log_var_c = packed[:, c_dim:2 * c_dim]
    c = packed[:, 2 * c_dim:3 * c_dim]
    return (mu_c, log_var_c), (mu_x, log_var_x), c


def _init_linear(key, in_dim, out_dim):
    """Deterministic PyTorch-style init: U(-1/sqrt(fan_in), 1/sqrt(fan_in))."""
    kw, kb = jax.random.split(key)
    bound = 1.0 / math.sqrt(in_dim)
    w = jax.random.uniform(kw, (in_dim, out_dim), jnp.float32, -bound, bound)
    b = jax.random.uniform(kb, (1, out_dim), jnp.float32, -bound, bound)
    return w, b


def _ref_forward(x, eps, enc_params, dec_params):
    """Pure-JAX reference for correctness checking."""
    h = x
    for i, (w, b) in enumerate(enc_params):
        h = h @ w + b
        if i != len(enc_params) - 1:
            h = jnp.maximum(h, 0.0)
    c_dim = eps.shape[1]
    mu_c, log_var_c = h[:, :c_dim], h[:, c_dim:2 * c_dim]
    c = mu_c + eps * jnp.exp(0.5 * log_var_c)
    g = c
    for i, (w, b) in enumerate(dec_params):
        g = g @ w + b
        if i != len(dec_params) - 1:
            g = jnp.maximum(g, 0.0)
    mu_x = jax.nn.sigmoid(g)
    return mu_c, log_var_c, c, mu_x


if __name__ == "__main__":
    # Shapes consistent with the module: net_args = dict(x_dim=128, c_dim=8,
    # m_dims=[64, 32], resnet18=False, split_output=True); vae_args = dict(log_var_x=0.0)
    x_dim, c_dim = 128, 8
    m_dims = [64, 32]
    log_var_x = 0.0

    key = jax.random.PRNGKey(0)
    kx, keps, kparams = jax.random.split(key, 3)

    # Encoder dims: x_dim -> reversed(m_dims) -> 2*c_dim  (split_output => output_multiplier=2)
    enc_dims = [x_dim] + m_dims[::-1] + [2 * c_dim]
    # Decoder dims: c_dim -> m_dims -> x_dim
    dec_dims = [c_dim] + m_dims + [x_dim]
    pkeys = jax.random.split(kparams, len(enc_dims) - 1 + len(dec_dims) - 1)
    enc_params = [_init_linear(pkeys[i], enc_dims[i], enc_dims[i + 1])
                  for i in range(len(enc_dims) - 1)]
    dec_params = [_init_linear(pkeys[len(enc_dims) - 1 + i], dec_dims[i], dec_dims[i + 1])
                  for i in range(len(dec_dims) - 1)]

    # --- test 1: small batch, single full-extent block ---
    N = 8
    x = jax.random.normal(kx, (N, x_dim), jnp.float32)
    eps = jax.random.normal(keps, (N, c_dim), jnp.float32)
    (mu_c, log_var_c), (mu_x, lvx), c = selfsup_forward(
        x, eps, enc_params, dec_params, log_var_x=log_var_x,
        compute_dtype=jnp.float32)   # f32 for exact check; bf16 is the bandwidth lever
    jax.block_until_ready((mu_c, log_var_c, mu_x, c))

    r_mu_c, r_log_var_c, r_c, r_mu_x = _ref_forward(x, eps, enc_params, dec_params)
    assert jnp.allclose(mu_c, r_mu_c, atol=1e-5, rtol=1e-5)
    assert jnp.allclose(log_var_c, r_log_var_c, atol=1e-5, rtol=1e-5)
    assert jnp.allclose(c, r_c, atol=1e-5, rtol=1e-5)
    assert jnp.allclose(mu_x, r_mu_x, atol=1e-5, rtol=1e-5)
    assert mu_c.shape == (N, c_dim) and mu_x.shape == (N, x_dim) and lvx == log_var_x

    # --- test 2: batch not a tile multiple -> exercises the pad-free masked edge block ---
    N2 = 1000
    kx2, keps2 = jax.random.split(jax.random.PRNGKey(1))
    x2 = jax.random.normal(kx2, (N2, x_dim), jnp.float32)
    eps2 = jax.random.normal(keps2, (N2, c_dim), jnp.float32)
    (mu_c2, log_var_c2), (mu_x2, _), c2 = selfsup_forward(
        x2, eps2, enc_params, dec_params, log_var_x=log_var_x,
        compute_dtype=jnp.float32)
    jax.block_until_ready((mu_c2, log_var_c2, mu_x2, c2))
    r_mu_c2, r_log_var_c2, r_c2, r_mu_x2 = _ref_forward(x2, eps2, enc_params, dec_params)
    assert jnp.allclose(mu_c2, r_mu_c2, atol=1e-5, rtol=1e-5)
    assert jnp.allclose(log_var_c2, r_log_var_c2, atol=1e-5, rtol=1e-5)
    assert jnp.allclose(c2, r_c2, atol=1e-5, rtol=1e-5)
    assert jnp.allclose(mu_x2, r_mu_x2, atol=1e-5, rtol=1e-5)

    print("KERNEL_OK")
</pallas_src>

<mosaic_0001>
module attributes {stable_mosaic.version = 11 : i64} {
  func.func @kernel(%arg0: i32, %arg1: memref<8x128xf32, #tpu.memory_space<vmem>>, %arg2: memref<8x8xf32, #tpu.memory_space<vmem>>, %arg3: memref<128x32xf32, #tpu.memory_space<vmem>>, %arg4: memref<1x32xf32, #tpu.memory_space<vmem>>, %arg5: memref<32x64xf32, #tpu.memory_space<vmem>>, %arg6: memref<1x64xf32, #tpu.memory_space<vmem>>, %arg7: memref<64x16xf32, #tpu.memory_space<vmem>>, %arg8: memref<1x16xf32, #tpu.memory_space<vmem>>, %arg9: memref<8x64xf32, #tpu.memory_space<vmem>>, %arg10: memref<1x64xf32, #tpu.memory_space<vmem>>, %arg11: memref<64x32xf32, #tpu.memory_space<vmem>>, %arg12: memref<1x32xf32, #tpu.memory_space<vmem>>, %arg13: memref<32x128xf32, #tpu.memory_space<vmem>>, %arg14: memref<1x128xf32, #tpu.memory_space<vmem>>, %arg15: memref<8x24xf32, #tpu.memory_space<vmem>>, %arg16: memref<8x128xf32, #tpu.memory_space<vmem>>) attributes {dimension_semantics = [#tpu.dimension_semantics<parallel>], iteration_bounds = array<i64: 1>, scalar_prefetch = 0 : i64, scratch_operands = 0 : i64, tpu.core_type = #tpu.core_type<tc>, window_params = [{transform_indices = @transform_0, window_bounds = array<i64: 8, 128>}, {transform_indices = @transform_1, window_bounds = array<i64: 8, 8>}, {pipeline_mode = #tpu.pipeline_mode<synchronous>, transform_indices = @transform_2, window_bounds = array<i64: 128, 32>}, {pipeline_mode = #tpu.pipeline_mode<synchronous>, transform_indices = @transform_3, window_bounds = array<i64: 1, 32>}, {pipeline_mode = #tpu.pipeline_mode<synchronous>, transform_indices = @transform_4, window_bounds = array<i64: 32, 64>}, {pipeline_mode = #tpu.pipeline_mode<synchronous>, transform_indices = @transform_5, window_bounds = array<i64: 1, 64>}, {pipeline_mode = #tpu.pipeline_mode<synchronous>, transform_indices = @transform_6, window_bounds = array<i64: 64, 16>}, {pipeline_mode = #tpu.pipeline_mode<synchronous>, transform_indices = @transform_7, window_bounds = array<i64: 1, 16>}, {pipeline_mode = #tpu.pipeline_mode<synchronous>, transform_indices = @transform_8, window_bounds = array<i64: 8, 64>}, {pipeline_mode = #tpu.pipeline_mode<synchronous>, transform_indices = @transform_9, window_bounds = array<i64: 1, 64>}, {pipeline_mode = #tpu.pipeline_mode<synchronous>, transform_indices = @transform_10, window_bounds = array<i64: 64, 32>}, {pipeline_mode = #tpu.pipeline_mode<synchronous>, transform_indices = @transform_11, window_bounds = array<i64: 1, 32>}, {pipeline_mode = #tpu.pipeline_mode<synchronous>, transform_indices = @transform_12, window_bounds = array<i64: 32, 128>}, {pipeline_mode = #tpu.pipeline_mode<synchronous>, transform_indices = @transform_13, window_bounds = array<i64: 1, 128>}, {transform_indices = @transform_14, window_bounds = array<i64: 8, 24>}, {transform_indices = @transform_15, window_bounds = array<i64: 8, 128>}]} {
    %c0 = arith.constant 0 : index
    %c0_0 = arith.constant 0 : index
    %0 = vector.load %arg1[%c0, %c0_0] : memref<8x128xf32, #tpu.memory_space<vmem>>, vector<8x128xf32>
    %c0_1 = arith.constant 0 : index
    %c0_2 = arith.constant 0 : index
    %1 = vector.load %arg3[%c0_1, %c0_2] : memref<128x32xf32, #tpu.memory_space<vmem>>, vector<128x32xf32>
    %cst = arith.constant dense<0.000000e+00> : vector<8x32xf32>
    %2 = tpu.matmul %0, %1, %cst {dimension_numbers = #tpu.dot_dimension_numbers<[1], [0], [0], [1], [0, 0, 1, 1], [], []>} : vector<8x128xf32>, vector<128x32xf32>, vector<8x32xf32> -> vector<8x32xf32>
    %c0_3 = arith.constant 0 : index
    %c0_4 = arith.constant 0 : index
    %3 = vector.load %arg4[%c0_3, %c0_4] : memref<1x32xf32, #tpu.memory_space<vmem>>, vector<1x32xf32>
    %4 = vector.broadcast %3 : vector<1x32xf32> to vector<8x32xf32>
    %5 = arith.addf %2, %4 : vector<8x32xf32>
    %cst_5 = arith.constant 0.000000e+00 : f32
    %6 = vector.broadcast %cst_5 : f32 to vector<8x32xf32>
    %7 = arith.maximumf %5, %6 : vector<8x32xf32>
    %c0_6 = arith.constant 0 : index
    %c0_7 = arith.constant 0 : index
    %8 = vector.load %arg5[%c0_6, %c0_7] : memref<32x64xf32, #tpu.memory_space<vmem>>, vector<32x64xf32>
    %cst_8 = arith.constant dense<0.000000e+00> : vector<8x64xf32>
    %9 = tpu.matmul %7, %8, %cst_8 {dimension_numbers = #tpu.dot_dimension_numbers<[1], [0], [0], [1], [0, 0, 1, 1], [], []>} : vector<8x32xf32>, vector<32x64xf32>, vector<8x64xf32> -> vector<8x64xf32>
    %c0_9 = arith.constant 0 : index
    %c0_10 = arith.constant 0 : index
    %10 = vector.load %arg6[%c0_9, %c0_10] : memref<1x64xf32, #tpu.memory_space<vmem>>, vector<1x64xf32>
    %11 = vector.broadcast %10 : vector<1x64xf32> to vector<8x64xf32>
    %12 = arith.addf %9, %11 : vector<8x64xf32>
    %cst_11 = arith.constant 0.000000e+00 : f32
    %13 = vector.broadcast %cst_11 : f32 to vector<8x64xf32>
    %14 = arith.maximumf %12, %13 : vector<8x64xf32>
    %c0_12 = arith.constant 0 : index
    %c0_13 = arith.constant 0 : index
    %15 = vector.load %arg7[%c0_12, %c0_13] : memref<64x16xf32, #tpu.memory_space<vmem>>, vector<64x16xf32>
    %cst_14 = arith.constant dense<0.000000e+00> : vector<8x16xf32>
    %16 = tpu.matmul %14, %15, %cst_14 {dimension_numbers = #tpu.dot_dimension_numbers<[1], [0], [0], [1], [0, 0, 1, 1], [], []>} : vector<8x64xf32>, vector<64x16xf32>, vector<8x16xf32> -> vector<8x16xf32>
    %c0_15 = arith.constant 0 : index
    %c0_16 = arith.constant 0 : index
    %17 = vector.load %arg8[%c0_15, %c0_16] : memref<1x16xf32, #tpu.memory_space<vmem>>, vector<1x16xf32>
    %18 = vector.broadcast %17 : vector<1x16xf32> to vector<8x16xf32>
    %19 = arith.addf %16, %18 : vector<8x16xf32>
    %20 = vector.extract_strided_slice %19 {offsets = [0, 0], sizes = [8, 8], strides = [1, 1]} : vector<8x16xf32> to vector<8x8xf32>
    %21 = vector.extract_strided_slice %19 {offsets = [0, 8], sizes = [8, 8], strides = [1, 1]} : vector<8x16xf32> to vector<8x8xf32>
    %c0_17 = arith.constant 0 : index
    %c0_18 = arith.constant 0 : index
    %22 = vector.load %arg2[%c0_17, %c0_18] : memref<8x8xf32, #tpu.memory_space<vmem>>, vector<8x8xf32>
    %cst_19 = arith.constant 5.000000e-01 : f32
    %23 = vector.broadcast %cst_19 : f32 to vector<8x8xf32>
    %24 = arith.mulf %23, %21 : vector<8x8xf32>
    %25 = math.exp %24 : vector<8x8xf32>
    %26 = arith.mulf %22, %25 : vector<8x8xf32>
    %27 = arith.addf %20, %26 : vector<8x8xf32>
    %28 = tpu.concatenate %19, %27 in 1 : vector<8x16xf32>, vector<8x8xf32> -> vector<8x24xf32>
    %c0_20 = arith.constant 0 : index
    %c0_21 = arith.constant 0 : index
    %29 = vector.load %arg15[%c0_20, %c0_21] : memref<8x24xf32, #tpu.memory_space<vmem>>, vector<8x24xf32>
    tpu.vector_store %arg15[%c0_20, %c0_21], %28 {strides = array<i32>} : memref<8x24xf32, #tpu.memory_space<vmem>>, vector<8x24xf32>,
    %c0_22 = arith.constant 0 : index
    %c0_23 = arith.constant 0 : index
    %30 = vector.load %arg9[%c0_22, %c0_23] : memref<8x64xf32, #tpu.memory_space<vmem>>, vector<8x64xf32>
    %cst_24 = arith.constant dense<0.000000e+00> : vector<8x64xf32>
    %31 = tpu.matmul %27, %30, %cst_24 {dimension_numbers = #tpu.dot_dimension_numbers<[1], [0], [0], [1], [0, 0, 1, 1], [], []>} : vector<8x8xf32>, vector<8x64xf32>, vector<8x64xf32> -> vector<8x64xf32>
    %c0_25 = arith.constant 0 : index
    %c0_26 = arith.constant 0 : index
    %32 = vector.load %arg10[%c0_25, %c0_26] : memref<1x64xf32, #tpu.memory_space<vmem>>, vector<1x64xf32>
    %33 = vector.broadcast %32 : vector<1x64xf32> to vector<8x64xf32>
    %34 = arith.addf %31, %33 : vector<8x64xf32>
    %cst_27 = arith.constant 0.000000e+00 : f32
    %35 = vector.broadcast %cst_27 : f32 to vector<8x64xf32>
    %36 = arith.maximumf %34, %35 : vector<8x64xf32>
    %c0_28 = arith.constant 0 : index
    %c0_29 = arith.constant 0 : index
    %37 = vector.load %arg11[%c0_28, %c0_29] : memref<64x32xf32, #tpu.memory_space<vmem>>, vector<64x32xf32>
    %cst_30 = arith.constant dense<0.000000e+00> : vector<8x32xf32>
    %38 = tpu.matmul %36, %37, %cst_30 {dimension_numbers = #tpu.dot_dimension_numbers<[1], [0], [0], [1], [0, 0, 1, 1], [], []>} : vector<8x64xf32>, vector<64x32xf32>, vector<8x32xf32> -> vector<8x32xf32>
    %c0_31 = arith.constant 0 : index
    %c0_32 = arith.constant 0 : index
    %39 = vector.load %arg12[%c0_31, %c0_32] : memref<1x32xf32, #tpu.memory_space<vmem>>, vector<1x32xf32>
    %40 = vector.broadcast %39 : vector<1x32xf32> to vector<8x32xf32>
    %41 = arith.addf %38, %40 : vector<8x32xf32>
    %cst_33 = arith.constant 0.000000e+00 : f32
    %42 = vector.broadcast %cst_33 : f32 to vector<8x32xf32>
    %43 = arith.maximumf %41, %42 : vector<8x32xf32>
    %c0_34 = arith.constant 0 : index
    %c0_35 = arith.constant 0 : index
    %44 = vector.load %arg13[%c0_34, %c0_35] : memref<32x128xf32, #tpu.memory_space<vmem>>, vector<32x128xf32>
    %cst_36 = arith.constant dense<0.000000e+00> : vector<8x128xf32>
    %45 = tpu.matmul %43, %44, %cst_36 {dimension_numbers = #tpu.dot_dimension_numbers<[1], [0], [0], [1], [0, 0, 1, 1], [], []>} : vector<8x32xf32>, vector<32x128xf32>, vector<8x128xf32> -> vector<8x128xf32>
    %c0_37 = arith.constant 0 : index
    %c0_38 = arith.constant 0 : index
    %46 = vector.load %arg14[%c0_37, %c0_38] : memref<1x128xf32, #tpu.memory_space<vmem>>, vector<1x128xf32>
    %47 = vector.broadcast %46 : vector<1x128xf32> to vector<8x128xf32>
    %48 = arith.addf %45, %47 : vector<8x128xf32>
    %cst_39 = arith.constant 5.000000e-01 : f32
    %49 = vector.broadcast %cst_39 : f32 to vector<8x128xf32>
    %50 = arith.mulf %49, %48 : vector<8x128xf32>
    %51 = math.tanh %50 : vector<8x128xf32>
    %cst_40 = arith.constant 5.000000e-01 : f32
    %52 = vector.broadcast %cst_40 : f32 to vector<8x128xf32>
    %53 = arith.mulf %52, %51 : vector<8x128xf32>
    %cst_41 = arith.constant 5.000000e-01 : f32
    %54 = vector.broadcast %cst_41 : f32 to vector<8x128xf32>
    %55 = arith.addf %53, %54 : vector<8x128xf32>
    %c0_42 = arith.constant 0 : index
    %c0_43 = arith.constant 0 : index
    %56 = vector.load %arg16[%c0_42, %c0_43] : memref<8x128xf32, #tpu.memory_space<vmem>>, vector<8x128xf32>
    tpu.vector_store %arg16[%c0_42, %c0_43], %55 {strides = array<i32>} : memref<8x128xf32, #tpu.memory_space<vmem>>, vector<8x128xf32>,
    return
  }
  func.func @transform_0(%arg0: i32) -> (i32, i32) {
    %c0_i32 = arith.constant 0 : i32
    %c0_i32_0 = arith.constant 0 : i32
    return %arg0, %c0_i32 : i32, i32
  }
  func.func @transform_1(%arg0: i32) -> (i32, i32) {
    %c0_i32 = arith.constant 0 : i32
    %c0_i32_0 = arith.constant 0 : i32
    return %arg0, %c0_i32 : i32, i32
  }
  func.func @transform_2(%arg0: i32) -> (i32, i32) {
    %c0_i32 = arith.constant 0 : i32
    %c0_i32_0 = arith.constant 0 : i32
    %c0_i32_1 = arith.constant 0 : i32
    return %c0_i32, %c0_i32_0 : i32, i32
  }
  func.func @transform_3(%arg0: i32) -> (i32, i32) {
    %c0_i32 = arith.constant 0 : i32
    %c0_i32_0 = arith.constant 0 : i32
    %c0_i32_1 = arith.constant 0 : i32
    return %c0_i32, %c0_i32_0 : i32, i32
  }
  func.func @transform_4(%arg0: i32) -> (i32, i32) {
    %c0_i32 = arith.constant 0 : i32
    %c0_i32_0 = arith.constant 0 : i32
    %c0_i32_1 = arith.constant 0 : i32
    return %c0_i32, %c0_i32_0 : i32, i32
  }
  func.func @transform_5(%arg0: i32) -> (i32, i32) {
    %c0_i32 = arith.constant 0 : i32
    %c0_i32_0 = arith.constant 0 : i32
    %c0_i32_1 = arith.constant 0 : i32
    return %c0_i32, %c0_i32_0 : i32, i32
  }
  func.func @transform_6(%arg0: i32) -> (i32, i32) {
    %c0_i32 = arith.constant 0 : i32
    %c0_i32_0 = arith.constant 0 : i32
    %c0_i32_1 = arith.constant 0 : i32
    return %c0_i32, %c0_i32_0 : i32, i32
  }
  func.func @transform_7(%arg0: i32) -> (i32, i32) {
    %c0_i32 = arith.constant 0 : i32
    %c0_i32_0 = arith.constant 0 : i32
    %c0_i32_1 = arith.constant 0 : i32
    return %c0_i32, %c0_i32_0 : i32, i32
  }
  func.func @transform_8(%arg0: i32) -> (i32, i32) {
    %c0_i32 = arith.constant 0 : i32
    %c0_i32_0 = arith.constant 0 : i32
    %c0_i32_1 = arith.constant 0 : i32
    return %c0_i32, %c0_i32_0 : i32, i32
  }
  func.func @transform_9(%arg0: i32) -> (i32, i32) {
    %c0_i32 = arith.constant 0 : i32
    %c0_i32_0 = arith.constant 0 : i32
    %c0_i32_1 = arith.constant 0 : i32
    return %c0_i32, %c0_i32_0 : i32, i32
  }
  func.func @transform_10(%arg0: i32) -> (i32, i32) {
    %c0_i32 = arith.constant 0 : i32
    %c0_i32_0 = arith.constant 0 : i32
    %c0_i32_1 = arith.constant 0 : i32
    return %c0_i32, %c0_i32_0 : i32, i32
  }
  func.func @transform_11(%arg0: i32) -> (i32, i32) {
    %c0_i32 = arith.constant 0 : i32
    %c0_i32_0 = arith.constant 0 : i32
    %c0_i32_1 = arith.constant 0 : i32
    return %c0_i32, %c0_i32_0 : i32, i32
  }
  func.func @transform_12(%arg0: i32) -> (i32, i32) {
    %c0_i32 = arith.constant 0 : i32
    %c0_i32_0 = arith.constant 0 : i32
    %c0_i32_1 = arith.constant 0 : i32
    return %c0_i32, %c0_i32_0 : i32, i32
  }
  func.func @transform_13(%arg0: i32) -> (i32, i32) {
    %c0_i32 = arith.constant 0 : i32
    %c0_i32_0 = arith.constant 0 : i32
    %c0_i32_1 = arith.constant 0 : i32
    return %c0_i32, %c0_i32_0 : i32, i32
  }
  func.func @transform_14(%arg0: i32) -> (i32, i32) {
    %c0_i32 = arith.constant 0 : i32
    %c0_i32_0 = arith.constant 0 : i32
    return %arg0, %c0_i32 : i32, i32
  }
  func.func @transform_15(%arg0: i32) -> (i32, i32) {
    %c0_i32 = arith.constant 0 : i32
    %c0_i32_0 = arith.constant 0 : i32
    return %arg0, %c0_i32 : i32, i32
  }
}

</mosaic_0001>

<llo_original>
// kernel: tpu_custom_call.1
$region0: #{tpu_custom_call.1}
  #allocation0 [shape = 'u32[]', space=smem, size = 0x4, offset = 0x4, fixed_abs, tag = 'smem constant byte address 0x4 - core index']
  #allocation1 [shape = 'u32[144,128]{1,0:T(1,128)}', space=vmem, size = 0x12000, scoped, tag = 'internal scratch']
  %s0 = inlined_call_operand.vmem [shape: f32[8,128], index: 0, kind: input, shape index: {}]
  %s1 = inlined_call_operand.vmem [shape: f32[8,8], index: 1, kind: input, shape index: {}]
  %s2 = inlined_call_operand.vmem [shape: f32[128,32], index: 2, kind: input, shape index: {}]
  %s3 = inlined_call_operand.vmem [shape: f32[1,32], index: 3, kind: input, shape index: {}]
  %s4 = inlined_call_operand.vmem [shape: f32[32,64], index: 4, kind: input, shape index: {}]
  %s5 = inlined_call_operand.vmem [shape: f32[1,64], index: 5, kind: input, shape index: {}]
  %s6 = inlined_call_operand.vmem [shape: f32[64,16], index: 6, kind: input, shape index: {}]
  %s7 = inlined_call_operand.vmem [shape: f32[1,16], index: 7, kind: input, shape index: {}]
  %s8 = inlined_call_operand.vmem [shape: f32[8,64], index: 8, kind: input, shape index: {}]
  %s9 = inlined_call_operand.vmem [shape: f32[1,64], index: 9, kind: input, shape index: {}]
  %s10 = inlined_call_operand.vmem [shape: f32[64,32], index: 10, kind: input, shape index: {}]
  %s11 = inlined_call_operand.vmem [shape: f32[1,32], index: 11, kind: input, shape index: {}]
  %s12 = inlined_call_operand.vmem [shape: f32[32,128], index: 12, kind: input, shape index: {}]
  %s13 = inlined_call_operand.vmem [shape: f32[1,128], index: 13, kind: input, shape index: {}]
  %s14 = inlined_call_operand.hbm [shape: f32[8,24], index: 14, kind: output, shape index: {0}]
  %s15 = inlined_call_operand.hbm [shape: f32[8,128], index: 15, kind: output, shape index: {1}]
  %16 = xla_tuple %s14, %s15
  %s17 = sld [smem:[#allocation0]]
  $region74: #{tpu_custom_call.1} parent=0
    _
  %s19 = ssub.s32 1, %s17
  %s20 = scalar_select 0, %s19, %s17
  $region1: #{tpu_custom_call.1} parent=0
    #allocation2 [shape = 'u8[4096]{0}', space=vmem, size = 0x1000, scoped, tag = 'output window, operand 0, single buffered']
    #allocation3 [shape = 's32[1]{0}', space=sflag, size = 0x4, scoped, tag = 'scoped memory for tpu_custom_call.1']
    #allocation4 [shape = 'u8[4096]{0}', space=vmem, size = 0x1000, scoped, tag = 'output window, operand 1, single buffered']
    #allocation5 [shape = 's32[1]{0}', space=sflag, size = 0x4, scoped, tag = 'scoped memory for tpu_custom_call.1']
    %21 = vsyncpa [#allocation3], 0
    %22 = vsyncpa [#allocation5], 0
    // Predicated region
    $region2: #{tpu_custom_call.1} parent=1 // pred_check
      _
    $region3: #{tpu_custom_call.1} parent=1 // pred_check_branch
      %24 = sbr.rel (0) target = $region5
    $region4: #{tpu_custom_call.1} parent=1 // pred_region
      _
    $region5: #{tpu_custom_call.1} parent=1 // pred_fallthru
      _
    // Predicated region
    $region6: #{tpu_custom_call.1} parent=1 // pred_check
      _
    $region7: #{tpu_custom_call.1} parent=1 // pred_check_branch
      %26 = sbr.rel (0) target = $region9
    $region8: #{tpu_custom_call.1} parent=1 // pred_region
      _
    $region9: #{tpu_custom_call.1} parent=1 // pred_fallthru
      _
    // Predicated region
    $region10: #{tpu_custom_call.1} parent=1 // pred_check
      _
    $region11: #{tpu_custom_call.1} parent=1 // pred_check_branch
      %28 = sbr.rel (0) target = $region13
    $region12: #{tpu_custom_call.1} parent=1 // pred_region
      _
    $region13: #{tpu_custom_call.1} parent=1 // pred_fallthru
      _
    // Predicated region
    $region14: #{tpu_custom_call.1} parent=1 // pred_check
      _
    $region15: #{tpu_custom_call.1} parent=1 // pred_check_branch
      %30 = sbr.rel (0) target = $region17
    $region16: #{tpu_custom_call.1} parent=1 // pred_region
      _
    $region17: #{tpu_custom_call.1} parent=1 // pred_fallthru
      _
    // Predicated region
    $region18: #{tpu_custom_call.1} parent=1 // pred_check
      _
    $region19: #{tpu_custom_call.1} parent=1 // pred_check_branch
      %32 = sbr.rel (0) target = $region21
    $region20: #{tpu_custom_call.1} parent=1 // pred_region
      _
    $region21: #{tpu_custom_call.1} parent=1 // pred_fallthru
      _
    // Predicated region
    $region22: #{tpu_custom_call.1} parent=1 // pred_check
      _
    $region23: #{tpu_custom_call.1} parent=1 // pred_check_branch
      %34 = sbr.rel (0) target = $region25
    $region24: #{tpu_custom_call.1} parent=1 // pred_region
      _
    $region25: #{tpu_custom_call.1} parent=1 // pred_fallthru
      _
    // Predicated region
    $region26: #{tpu_custom_call.1} parent=1 // pred_check
      _
    $region27: #{tpu_custom_call.1} parent=1 // pred_check_branch
      %36 = sbr.rel (0) target = $region29
    $region28: #{tpu_custom_call.1} parent=1 // pred_region
      _
    $region29: #{tpu_custom_call.1} parent=1 // pred_fallthru
      _
    // Predicated region
    $region30: #{tpu_custom_call.1} parent=1 // pred_check
      _
    $region31: #{tpu_custom_call.1} parent=1 // pred_check_branch
      %38 = sbr.rel (0) target = $region33
    $region32: #{tpu_custom_call.1} parent=1 // pred_region
      _
    $region33: #{tpu_custom_call.1} parent=1 // pred_fallthru
      _
    // Predicated region
    $region34: #{tpu_custom_call.1} parent=1 // pred_check
      _
    $region35: #{tpu_custom_call.1} parent=1 // pred_check_branch
      %40 = sbr.rel (0) target = $region37
    $region36: #{tpu_custom_call.1} parent=1 // pred_region
      _
    $region37: #{tpu_custom_call.1} parent=1 // pred_fallthru
      _
    // Predicated region
    $region38: #{tpu_custom_call.1} parent=1 // pred_check
      _
    $region39: #{tpu_custom_call.1} parent=1 // pred_check_branch
      %42 = sbr.rel (0) target = $region41
    $region40: #{tpu_custom_call.1} parent=1 // pred_region
      _
    $region41: #{tpu_custom_call.1} parent=1 // pred_fallthru
      _
    // Predicated region
    $region42: #{tpu_custom_call.1} parent=1 // pred_check
      _
    $region43: #{tpu_custom_call.1} parent=1 // pred_check_branch
      %44 = sbr.rel (0) target = $region45
    $region44: #{tpu_custom_call.1} parent=1 // pred_region
      _
    $region45: #{tpu_custom_call.1} parent=1 // pred_fallthru
      _
    // Predicated region
    $region46: #{tpu_custom_call.1} parent=1 // pred_check
      _
    $region47: #{tpu_custom_call.1} parent=1 // pred_check_branch
      %46 = sbr.rel (0) target = $region49
    $region48: #{tpu_custom_call.1} parent=1 // pred_region
      _
    $region49: #{tpu_custom_call.1} parent=1 // pred_fallthru
      _
    // Predicated region
    $region50: #{tpu_custom_call.1} parent=1 // pred_check
      _
    $region51: #{tpu_custom_call.1} parent=1 // pred_check_branch
      %48 = sbr.rel (0) target = $region53
    $region52: #{tpu_custom_call.1} parent=1 // pred_region
      _
    $region53: #{tpu_custom_call.1} parent=1 // pred_fallthru
      _
    // Predicated region
    $region54: #{tpu_custom_call.1} parent=1 // pred_check
      _
    $region55: #{tpu_custom_call.1} parent=1 // pred_check_branch
      %50 = sbr.rel (0) target = $region57
    $region56: #{tpu_custom_call.1} parent=1 // pred_region
      _
    $region57: #{tpu_custom_call.1} parent=1 // pred_fallthru
      _
    %v51 = vld [vmem:[%s0] sm:$0xff]
    %v52 = vld [vmem:[%s2] sm:$0xff]
    %v53 = vld [vmem:[%s2 + $0x8] sm:$0xff]
    %v54 = vld [vmem:[%s2 + $0x10] sm:$0xff]
    %v55 = vld [vmem:[%s2 + $0x18] sm:$0xff]
    %v56 = vld [vmem:[%s2 + $0x20] sm:$0xff]
    %v57 = vld [vmem:[%s2 + $0x28] sm:$0xff]
    %v58 = vld [vmem:[%s2 + $0x30] sm:$0xff]
    %v59 = vld [vmem:[%s2 + $0x38] sm:$0xff]
    %v60 = vld [vmem:[%s2 + $0x40] sm:$0xff]
    %v61 = vld [vmem:[%s2 + $0x48] sm:$0xff]
    %v62 = vld [vmem:[%s2 + $0x50] sm:$0xff]
    %v63 = vld [vmem:[%s2 + $0x58] sm:$0xff]
    %v64 = vld [vmem:[%s2 + $0x60] sm:$0xff]
    %v65 = vld [vmem:[%s2 + $0x68] sm:$0xff]
    %v66 = vld [vmem:[%s2 + $0x70] sm:$0xff]
    %v67 = vld [vmem:[%s2 + $0x78] sm:$0xff]
    %v68 = vld [vmem:[%s3] sm:$0x1]
    %v70 = vlaneseq
    %v71 = vshrl.u32 %v70, 7
    %v72 = vsub.s32 0, %v71
    %v73 = vrot.slane %v68, %v72
    %75 = vmatprep.subr.mxu0 0.0
    %76 = vmatpush1.msra.mxu0 %v52
    %77 = vmatprep.subr.mxu0 0.0
    %78 = vmatpush1.msra.mxu0 %v53
    %79 = vmatprep.subr.mxu0 0.0
    %80 = vmatpush1.msra.mxu0 %v54
    %81 = vmatprep.subr.mxu0 0.0
    %82 = vmatpush1.msra.mxu0 %v55
    %83 = vmatprep.subr.mxu0 0.0
    %84 = vmatpush1.msra.mxu0 %v56
    %85 = vmatprep.subr.mxu0 0.0
    %86 = vmatpush1.msra.mxu0 %v57
    %87 = vmatprep.subr.mxu0 0.0
    %88 = vmatpush1.msra.mxu0 %v58
    %89 = vmatprep.subr.mxu0 0.0
    %90 = vmatpush1.msra.mxu0 %v59
    %91 = vmatprep.subr.mxu0 0.0
    %92 = vmatpush1.msra.mxu0 %v60
    %93 = vmatprep.subr.mxu0 0.0
    %94 = vmatpush1.msra.mxu0 %v61
    %95 = vmatprep.subr.mxu0 0.0
    %96 = vmatpush1.msra.mxu0 %v62
    %97 = vmatprep.subr.mxu0 0.0
    %98 = vmatpush1.msra.mxu0 %v63
    %99 = vmatprep.subr.mxu0 0.0
    %100 = vmatpush1.msra.mxu0 %v64
    %101 = vmatprep.subr.mxu0 0.0
    %102 = vmatpush1.msra.mxu0 %v65
    %103 = vmatprep.subr.mxu0 0.0
    %104 = vmatpush1.msra.mxu0 %v66
    %105 = vmatprep.subr.mxu0 0.0
    %106 = vmatpush1.msra.mxu0 %v67
    %107 = vmatprep.subr.mxu0 0.0
    %108 = vmatpush1.msra.mxu0 0.0
    %109 = vmatprep.subr.mxu0 0.0
    %110 = vmatpush1.msra.mxu0 0.0
    %111 = vmatprep.subr.mxu0 0.0
    %112 = vmatpush1.msra.mxu0 0.0
    %113 = vmatprep.subr.mxu0 0.0
    %114 = vmatpush1.msra.mxu0 0.0
    %115 = vmatprep.subr.mxu0 0.0
    %116 = vmatpush1.msra.mxu0 0.0
    %117 = vmatprep.subr.mxu0 0.0
    %118 = vmatpush1.msra.mxu0 0.0
    %119 = vmatprep.subr.mxu0 0.0
    %120 = vmatpush1.msra.mxu0 0.0
    %121 = vmatprep.subr.mxu0 0.0
    %122 = vmatpush1.msra.mxu0 0.0
    %123 = vmatprep.subr.mxu0 0.0
    %124 = vmatpush1.msra.mxu0 0.0
    %125 = vmatprep.subr.mxu0 0.0
    %126 = vmatpush1.msra.mxu0 0.0
    %127 = vmatprep.subr.mxu0 0.0
    %128 = vmatpush1.msra.mxu0 0.0
    %129 = vmatprep.subr.mxu0 0.0
    %130 = vmatpush1.msra.mxu0 0.0
    %131 = vmatprep.subr.mxu0 0.0
    %132 = vmatpush1.msra.mxu0 0.0
    %133 = vmatprep.subr.mxu0 0.0
    %134 = vmatpush1.msra.mxu0 0.0
    %135 = vmatprep.subr.mxu0 0.0
    %136 = vmatpush1.msra.mxu0 0.0
    %137 = vmatprep.subr.mxu0 0.0
    %138 = vmatpush1.msra.mxu0 0.0
    %139 = vmatprep.mubr.f32.mxu0 0.0
    %140 = vmatmul.mubr.f32.gmra.mrb[0].mxu0 %v51
    %v141 = vpop.f32.mrb[0].mxu0
    %v142 = vadd.f32 %v73, %v141
    %v143 = vpop.f32.mrb[0].mxu0
    %144 = vdwg.mxu0
    %v145 = vmax.f32 %v142, 0.0
    %v146 = vld [vmem:[%s4] sm:$0xff]
    %v147 = vld [vmem:[%s4 + $0x8] sm:$0xff]
    %v148 = vld [vmem:[%s4 + $0x10] sm:$0xff]
    %v149 = vld [vmem:[%s4 + $0x18] sm:$0xff]
    %v150 = vld [vmem:[%s5] sm:$0x1]
    %v152 = vlaneseq
    %v153 = vshrl.u32 %v152, 7
    %v154 = vsub.s32 0, %v153
    %v155 = vrot.slane %v150, %v154
    %vm157 = vcmask 261120
    %v159 = vsel %vm157, %v145, 0
    %161 = vmatprep.subr.mxu0 0.0
    %162 = vmatpush1.msra.mxu0 %v146
    %163 = vmatprep.subr.mxu0 0.0
    %164 = vmatpush1.msra.mxu0 %v147
    %165 = vmatprep.subr.mxu0 0.0
    %166 = vmatpush1.msra.mxu0 %v148
    %167 = vmatprep.subr.mxu0 0.0
    %168 = vmatpush1.msra.mxu0 %v149
    %169 = vmatprep.subr.mxu0 0.0
    %170 = vmatpush1.msra.mxu0 0.0
    %171 = vmatprep.subr.mxu0 0.0
    %172 = vmatpush1.msra.mxu0 0.0
    %173 = vmatprep.subr.mxu0 0.0
    %174 = vmatpush1.msra.mxu0 0.0
    %175 = vmatprep.subr.mxu0 0.0
    %176 = vmatpush1.msra.mxu0 0.0
    %177 = vmatprep.subr.mxu0 0.0
    %178 = vmatpush1.msra.mxu0 0.0
    %179 = vmatprep.subr.mxu0 0.0
    %180 = vmatpush1.msra.mxu0 0.0
    %181 = vmatprep.subr.mxu0 0.0
    %182 = vmatpush1.msra.mxu0 0.0
    %183 = vmatprep.subr.mxu0 0.0
    %184 = vmatpush1.msra.mxu0 0.0
    %185 = vmatprep.subr.mxu0 0.0
    %186 = vmatpush1.msra.mxu0 0.0
    %187 = vmatprep.subr.mxu0 0.0
    %188 = vmatpush1.msra.mxu0 0.0
    %189 = vmatprep.subr.mxu0 0.0
    %190 = vmatpush1.msra.mxu0 0.0
    %191 = vmatprep.subr.mxu0 0.0
    %192 = vmatpush1.msra.mxu0 0.0
    %193 = vmatprep.subr.mxu0 0.0
    %194 = vmatpush1.msra.mxu0 0.0
    %195 = vmatprep.subr.mxu0 0.0
    %196 = vmatpush1.msra.mxu0 0.0
    %197 = vmatprep.subr.mxu0 0.0
    %198 = vmatpush1.msra.mxu0 0.0
    %199 = vmatprep.subr.mxu0 0.0
    %200 = vmatpush1.msra.mxu0 0.0
    %201 = vmatprep.subr.mxu0 0.0
    %202 = vmatpush1.msra.mxu0 0.0
    %203 = vmatprep.subr.mxu0 0.0
    %204 = vmatpush1.msra.mxu0 0.0
    %205 = vmatprep.subr.mxu0 0.0
    %206 = vmatpush1.msra.mxu0 0.0
    %207 = vmatprep.subr.mxu0 0.0
    %208 = vmatpush1.msra.mxu0 0.0
    %209 = vmatprep.subr.mxu0 0.0
    %210 = vmatpush1.msra.mxu0 0.0
    %211 = vmatprep.subr.mxu0 0.0
    %212 = vmatpush1.msra.mxu0 0.0
    %213 = vmatprep.subr.mxu0 0.0
    %214 = vmatpush1.msra.mxu0 0.0
    %215 = vmatprep.subr.mxu0 0.0
    %216 = vmatpush1.msra.mxu0 0.0
    %217 = vmatprep.subr.mxu0 0.0
    %218 = vmatpush1.msra.mxu0 0.0
    %219 = vmatprep.subr.mxu0 0.0
    %220 = vmatpush1.msra.mxu0 0.0
    %221 = vmatprep.subr.mxu0 0.0
    %222 = vmatpush1.msra.mxu0 0.0
    %223 = vmatprep.subr.mxu0 0.0
    %224 = vmatpush1.msra.mxu0 0.0
    %225 = vmatprep.mubr.f32.mxu0 0.0
    %226 = vmatmul.mubr.f32.gmra.mrb[0].mxu0 %v159
    %v227 = vpop.f32.mrb[0].mxu0
    %v228 = vadd.f32 %v155, %v227
    %v229 = vpop.f32.mrb[0].mxu0
    %230 = vdwg.mxu0
    %v231 = vmax.f32 %v228, 0.0
    %v232 = vld [vmem:[%s6] sm:$0xff]
    %v233 = vld [vmem:[%s6 + $0x8] sm:$0xff]
    %v234 = vld [vmem:[%s6 + $0x10] sm:$0xff]
    %v235 = vld [vmem:[%s6 + $0x18] sm:$0xff]
    %v236 = vld [vmem:[%s6 + $0x20] sm:$0xff]
    %v237 = vld [vmem:[%s6 + $0x28] sm:$0xff]
    %v238 = vld [vmem:[%s6 + $0x30] sm:$0xff]
    %v239 = vld [vmem:[%s6 + $0x38] sm:$0xff]
    %v240 = vld [vmem:[%s7] sm:$0x1]
    %v242 = vlaneseq
    %v243 = vshrl.u32 %v242, 7
    %v244 = vsub.s32 0, %v243
    %v245 = vrot.slane %v240, %v244
    %vm247 = vcmask 523264
    %v249 = vsel %vm247, %v231, 0
    %251 = vmatprep.subr.mxu0 0.0
    %252 = vmatpush1.msra.mxu0 %v232
    %253 = vmatprep.subr.mxu0 0.0
    %254 = vmatpush1.msra.mxu0 %v233
    %255 = vmatprep.subr.mxu0 0.0
    %256 = vmatpush1.msra.mxu0 %v234
    %257 = vmatprep.subr.mxu0 0.0
    %258 = vmatpush1.msra.mxu0 %v235
    %259 = vmatprep.subr.mxu0 0.0
    %260 = vmatpush1.msra.mxu0 %v236
    %261 = vmatprep.subr.mxu0 0.0
    %262 = vmatpush1.msra.mxu0 %v237
    %263 = vmatprep.subr.mxu0 0.0
    %264 = vmatpush1.msra.mxu0 %v238
    %265 = vmatprep.subr.mxu0 0.0
    %266 = vmatpush1.msra.mxu0 %v239
    %267 = vmatprep.subr.mxu0 0.0
    %268 = vmatpush1.msra.mxu0 0.0
    %269 = vmatprep.subr.mxu0 0.0
    %270 = vmatpush1.msra.mxu0 0.0
    %271 = vmatprep.subr.mxu0 0.0
    %272 = vmatpush1.msra.mxu0 0.0
    %273 = vmatprep.subr.mxu0 0.0
    %274 = vmatpush1.msra.mxu0 0.0
    %275 = vmatprep.subr.mxu0 0.0
    %276 = vmatpush1.msra.mxu0 0.0
    %277 = vmatprep.subr.mxu0 0.0
    %278 = vmatpush1.msra.mxu0 0.0
    %279 = vmatprep.subr.mxu0 0.0
    %280 = vmatpush1.msra.mxu0 0.0
    %281 = vmatprep.subr.mxu0 0.0
    %282 = vmatpush1.msra.mxu0 0.0
    %283 = vmatprep.subr.mxu0 0.0
    %284 = vmatpush1.msra.mxu0 0.0
    %285 = vmatprep.subr.mxu0 0.0
    %286 = vmatpush1.msra.mxu0 0.0
    %287 = vmatprep.subr.mxu0 0.0
    %288 = vmatpush1.msra.mxu0 0.0
    %289 = vmatprep.subr.mxu0 0.0
    %290 = vmatpush1.msra.mxu0 0.0
    %291 = vmatprep.subr.mxu0 0.0
    %292 = vmatpush1.msra.mxu0 0.0
    %293 = vmatprep.subr.mxu0 0.0
    %294 = vmatpush1.msra.mxu0 0.0
    %295 = vmatprep.subr.mxu0 0.0
    %296 = vmatpush1.msra.mxu0 0.0
    %297 = vmatprep.subr.mxu0 0.0
    %298 = vmatpush1.msra.mxu0 0.0
    %299 = vmatprep.subr.mxu0 0.0
    %300 = vmatpush1.msra.mxu0 0.0
    %301 = vmatprep.subr.mxu0 0.0
    %302 = vmatpush1.msra.mxu0 0.0
    %303 = vmatprep.subr.mxu0 0.0
    %304 = vmatpush1.msra.mxu0 0.0
    %305 = vmatprep.subr.mxu0 0.0
    %306 = vmatpush1.msra.mxu0 0.0
    %307 = vmatprep.subr.mxu0 0.0
    %308 = vmatpush1.msra.mxu0 0.0
    %309 = vmatprep.subr.mxu0 0.0
    %310 = vmatpush1.msra.mxu0 0.0
    %311 = vmatprep.subr.mxu0 0.0
    %312 = vmatpush1.msra.mxu0 0.0
    %313 = vmatprep.subr.mxu0 0.0
    %314 = vmatpush1.msra.mxu0 0.0
    %315 = vmatprep.mubr.f32.mxu0 0.0
    %316 = vmatmul.mubr.f32.gmra.mrb[0].mxu0 %v249
    %v317 = vpop.f32.mrb[0].mxu0
    %v318 = vadd.f32 %v245, %v317
    %v319 = vpop.f32.mrb[0].mxu0
    %320 = vdwg.mxu0
    %v321 = vld [vmem:[%s1] sm:$0xff]
    %v322 = vmul.f32 %v318, 0.5
    %v323 = vmul.f32 %v322, 1.442695
    %v324 = vpow.pop %v323
    %326 = vrot.lane.b32.xlu0 %v324, 120
    %v327 = vpop.permute.xlu0 %326
    %v329 = vmul.f32 %v321, %v327
    %v330 = vadd.f32 %v318, %v329
    %332 = vrot.lane.b32.xlu0 %v330, 16
    %v333 = vpop.permute.xlu0 %332
    %vm335 = vcmask 130048
    %v336 = vsel %vm335, %v318, %v333
    %vm337 = vcmask 195584
    %338 = vst.msk [vmem:[#allocation2] sm:$0xff] %vm337, %v336
    %v339 = vld [vmem:[%s8] sm:$0xff]
    %v340 = vld [vmem:[%s9] sm:$0x1]
    %v342 = vlaneseq
    %v343 = vshrl.u32 %v342, 7
    %v344 = vsub.s32 0, %v343
    %v345 = vrot.slane %v340, %v344
    %vm347 = vcmask 64512
    %v348 = vsel %vm347, %v330, 0
    %350 = vmatprep.subr.mxu0 0.0
    %351 = vmatpush1.msra.mxu0 %v339
    %352 = vmatprep.subr.mxu0 0.0
    %353 = vmatpush1.msra.mxu0 0.0
    %354 = vmatprep.subr.mxu0 0.0
    %355 = vmatpush1.msra.mxu0 0.0
    %356 = vmatprep.subr.mxu0 0.0
    %357 = vmatpush1.msra.mxu0 0.0
    %358 = vmatprep.subr.mxu0 0.0
    %359 = vmatpush1.msra.mxu0 0.0
    %360 = vmatprep.subr.mxu0 0.0
    %361 = vmatpush1.msra.mxu0 0.0
    %362 = vmatprep.subr.mxu0 0.0
    %363 = vmatpush1.msra.mxu0 0.0
    %364 = vmatprep.subr.mxu0 0.0
    %365 = vmatpush1.msra.mxu0 0.0
    %366 = vmatprep.subr.mxu0 0.0
    %367 = vmatpush1.msra.mxu0 0.0
    %368 = vmatprep.subr.mxu0 0.0
    %369 = vmatpush1.msra.mxu0 0.0
    %370 = vmatprep.subr.mxu0 0.0
    %371 = vmatpush1.msra.mxu0 0.0
    %372 = vmatprep.subr.mxu0 0.0
    %373 = vmatpush1.msra.mxu0 0.0
    %374 = vmatprep.subr.mxu0 0.0
    %375 = vmatpush1.msra.mxu0 0.0
    %376 = vmatprep.subr.mxu0 0.0
    %377 = vmatpush1.msra.mxu0 0.0
    %378 = vmatprep.subr.mxu0 0.0
    %379 = vmatpush1.msra.mxu0 0.0
    %380 = vmatprep.subr.mxu0 0.0
    %381 = vmatpush1.msra.mxu0 0.0
    %382 = vmatprep.subr.mxu0 0.0
    %383 = vmatpush1.msra.mxu0 0.0
    %384 = vmatprep.subr.mxu0 0.0
    %385 = vmatpush1.msra.mxu0 0.0
    %386 = vmatprep.subr.mxu0 0.0
    %387 = vmatpush1.msra.mxu0 0.0
    %388 = vmatprep.subr.mxu0 0.0
    %389 = vmatpush1.msra.mxu0 0.0
    %390 = vmatprep.subr.mxu0 0.0
    %391 = vmatpush1.msra.mxu0 0.0
    %392 = vmatprep.subr.mxu0 0.0
    %393 = vmatpush1.msra.mxu0 0.0
    %394 = vmatprep.subr.mxu0 0.0
    %395 = vmatpush1.msra.mxu0 0.0
    %396 = vmatprep.subr.mxu0 0.0
    %397 = vmatpush1.msra.mxu0 0.0
    %398 = vmatprep.subr.mxu0 0.0
    %399 = vmatpush1.msra.mxu0 0.0
    %400 = vmatprep.subr.mxu0 0.0
    %401 = vmatpush1.msra.mxu0 0.0
    %402 = vmatprep.subr.mxu0 0.0
    %403 = vmatpush1.msra.mxu0 0.0
    %404 = vmatprep.subr.mxu0 0.0
    %405 = vmatpush1.msra.mxu0 0.0
    %406 = vmatprep.subr.mxu0 0.0
    %407 = vmatpush1.msra.mxu0 0.0
    %408 = vmatprep.subr.mxu0 0.0
    %409 = vmatpush1.msra.mxu0 0.0
    %410 = vmatprep.subr.mxu0 0.0
    %411 = vmatpush1.msra.mxu0 0.0
    %412 = vmatprep.subr.mxu0 0.0
    %413 = vmatpush1.msra.mxu0 0.0
    %414 = vmatprep.mubr.f32.mxu0 0.0
    %415 = vmatmul.mubr.f32.gmra.mrb[0].mxu0 %v348
    %v416 = vpop.f32.mrb[0].mxu0
    %v417 = vadd.f32 %v345, %v416
    %v418 = vpop.f32.mrb[0].mxu0
    %419 = vdwg.mxu0
    %v420 = vmax.f32 %v417, 0.0
    %v421 = vld [vmem:[%s10] sm:$0xff]
    %v422 = vld [vmem:[%s10 + $0x8] sm:$0xff]
    %v423 = vld [vmem:[%s10 + $0x10] sm:$0xff]
    %v424 = vld [vmem:[%s10 + $0x18] sm:$0xff]
    %v425 = vld [vmem:[%s10 + $0x20] sm:$0xff]
    %v426 = vld [vmem:[%s10 + $0x28] sm:$0xff]
    %v427 = vld [vmem:[%s10 + $0x30] sm:$0xff]
    %v428 = vld [vmem:[%s10 + $0x38] sm:$0xff]
    %v429 = vld [vmem:[%s11] sm:$0x1]
    %v431 = vlaneseq
    %v432 = vshrl.u32 %v431, 7
    %v433 = vsub.s32 0, %v432
    %v434 = vrot.slane %v429, %v433
    %v437 = vsel %vm247, %v420, 0
    %439 = vmatprep.subr.mxu0 0.0
    %440 = vmatpush1.msra.mxu0 %v421
    %441 = vmatprep.subr.mxu0 0.0
    %442 = vmatpush1.msra.mxu0 %v422
    %443 = vmatprep.subr.mxu0 0.0
    %444 = vmatpush1.msra.mxu0 %v423
    %445 = vmatprep.subr.mxu0 0.0
    %446 = vmatpush1.msra.mxu0 %v424
    %447 = vmatprep.subr.mxu0 0.0
    %448 = vmatpush1.msra.mxu0 %v425
    %449 = vmatprep.subr.mxu0 0.0
    %450 = vmatpush1.msra.mxu0 %v426
    %451 = vmatprep.subr.mxu0 0.0
    %452 = vmatpush1.msra.mxu0 %v427
    %453 = vmatprep.subr.mxu0 0.0
    %454 = vmatpush1.msra.mxu0 %v428
    %455 = vmatprep.subr.mxu0 0.0
    %456 = vmatpush1.msra.mxu0 0.0
    %457 = vmatprep.subr.mxu0 0.0
    %458 = vmatpush1.msra.mxu0 0.0
    %459 = vmatprep.subr.mxu0 0.0
    %460 = vmatpush1.msra.mxu0 0.0
    %461 = vmatprep.subr.mxu0 0.0
    %462 = vmatpush1.msra.mxu0 0.0
    %463 = vmatprep.subr.mxu0 0.0
    %464 = vmatpush1.msra.mxu0 0.0
    %465 = vmatprep.subr.mxu0 0.0
    %466 = vmatpush1.msra.mxu0 0.0
    %467 = vmatprep.subr.mxu0 0.0
    %468 = vmatpush1.msra.mxu0 0.0
    %469 = vmatprep.subr.mxu0 0.0
    %470 = vmatpush1.msra.mxu0 0.0
    %471 = vmatprep.subr.mxu0 0.0
    %472 = vmatpush1.msra.mxu0 0.0
    %473 = vmatprep.subr.mxu0 0.0
    %474 = vmatpush1.msra.mxu0 0.0
    %475 = vmatprep.subr.mxu0 0.0
    %476 = vmatpush1.msra.mxu0 0.0
    %477 = vmatprep.subr.mxu0 0.0
    %478 = vmatpush1.msra.mxu0 0.0
    %479 = vmatprep.subr.mxu0 0.0
    %480 = vmatpush1.msra.mxu0 0.0
    %481 = vmatprep.subr.mxu0 0.0
    %482 = vmatpush1.msra.mxu0 0.0
    %483 = vmatprep.subr.mxu0 0.0
    %484 = vmatpush1.msra.mxu0 0.0
    %485 = vmatprep.subr.mxu0 0.0
    %486 = vmatpush1.msra.mxu0 0.0
    %487 = vmatprep.subr.mxu0 0.0
    %488 = vmatpush1.msra.mxu0 0.0
    %489 = vmatprep.subr.mxu0 0.0
    %490 = vmatpush1.msra.mxu0 0.0
    %491 = vmatprep.subr.mxu0 0.0
    %492 = vmatpush1.msra.mxu0 0.0
    %493 = vmatprep.subr.mxu0 0.0
    %494 = vmatpush1.msra.mxu0 0.0
    %495 = vmatprep.subr.mxu0 0.0
    %496 = vmatpush1.msra.mxu0 0.0
    %497 = vmatprep.subr.mxu0 0.0
    %498 = vmatpush1.msra.mxu0 0.0
    %499 = vmatprep.subr.mxu0 0.0
    %500 = vmatpush1.msra.mxu0 0.0
    %501 = vmatprep.subr.mxu0 0.0
    %502 = vmatpush1.msra.mxu0 0.0
    %503 = vmatprep.mubr.f32.mxu0 0.0
    %504 = vmatmul.mubr.f32.gmra.mrb[0].mxu0 %v437
    %v505 = vpop.f32.mrb[0].mxu0
    %v506 = vadd.f32 %v434, %v505
    %v507 = vpop.f32.mrb[0].mxu0
    %508 = vdwg.mxu0
    %v509 = vmax.f32 %v506, 0.0
    %v510 = vld [vmem:[%s12] sm:$0xff]
    %v511 = vld [vmem:[%s12 + $0x8] sm:$0xff]
    %v512 = vld [vmem:[%s12 + $0x10] sm:$0xff]
    %v513 = vld [vmem:[%s12 + $0x18] sm:$0xff]
    %v514 = vld [vmem:[%s13] sm:$0x1]
    %v516 = vlaneseq
    %v517 = vshrl.u32 %v516, 7
    %v518 = vsub.s32 0, %v517
    %v519 = vrot.slane %v514, %v518
    %v522 = vsel %vm157, %v509, 0
    %524 = vmatprep.subr.mxu0 0.0
    %525 = vmatpush1.msra.mxu0 %v510
    %526 = vmatprep.subr.mxu0 0.0
    %527 = vmatpush1.msra.mxu0 %v511
    %528 = vmatprep.subr.mxu0 0.0
    %529 = vmatpush1.msra.mxu0 %v512
    %530 = vmatprep.subr.mxu0 0.0
    %531 = vmatpush1.msra.mxu0 %v513
    %532 = vmatprep.subr.mxu0 0.0
    %533 = vmatpush1.msra.mxu0 0.0
    %534 = vmatprep.subr.mxu0 0.0
    %535 = vmatpush1.msra.mxu0 0.0
    %536 = vmatprep.subr.mxu0 0.0
    %537 = vmatpush1.msra.mxu0 0.0
    %538 = vmatprep.subr.mxu0 0.0
    %539 = vmatpush1.msra.mxu0 0.0
    %540 = vmatprep.subr.mxu0 0.0
    %541 = vmatpush1.msra.mxu0 0.0
    %542 = vmatprep.subr.mxu0 0.0
    %543 = vmatpush1.msra.mxu0 0.0
    %544 = vmatprep.subr.mxu0 0.0
    %545 = vmatpush1.msra.mxu0 0.0
    %546 = vmatprep.subr.mxu0 0.0
    %547 = vmatpush1.msra.mxu0 0.0
    %548 = vmatprep.subr.mxu0 0.0
    %549 = vmatpush1.msra.mxu0 0.0
    %550 = vmatprep.subr.mxu0 0.0
    %551 = vmatpush1.msra.mxu0 0.0
    %552 = vmatprep.subr.mxu0 0.0
    %553 = vmatpush1.msra.mxu0 0.0
    %554 = vmatprep.subr.mxu0 0.0
    %555 = vmatpush1.msra.mxu0 0.0
    %556 = vmatprep.subr.mxu0 0.0
    %557 = vmatpush1.msra.mxu0 0.0
    %558 = vmatprep.subr.mxu0 0.0
    %559 = vmatpush1.msra.mxu0 0.0
    %560 = vmatprep.subr.mxu0 0.0
    %561 = vmatpush1.msra.mxu0 0.0
    %562 = vmatprep.subr.mxu0 0.0
    %563 = vmatpush1.msra.mxu0 0.0
    %564 = vmatprep.subr.mxu0 0.0
    %565 = vmatpush1.msra.mxu0 0.0
    %566 = vmatprep.subr.mxu0 0.0
    %567 = vmatpush1.msra.mxu0 0.0
    %568 = vmatprep.subr.mxu0 0.0
    %569 = vmatpush1.msra.mxu0 0.0
    %570 = vmatprep.subr.mxu0 0.0
    %571 = vmatpush1.msra.mxu0 0.0
    %572 = vmatprep.subr.mxu0 0.0
    %573 = vmatpush1.msra.mxu0 0.0
    %574 = vmatprep.subr.mxu0 0.0
    %575 = vmatpush1.msra.mxu0 0.0
    %576 = vmatprep.subr.mxu0 0.0
    %577 = vmatpush1.msra.mxu0 0.0
    %578 = vmatprep.subr.mxu0 0.0
    %579 = vmatpush1.msra.mxu0 0.0
    %580 = vmatprep.subr.mxu0 0.0
    %581 = vmatpush1.msra.mxu0 0.0
    %582 = vmatprep.subr.mxu0 0.0
    %583 = vmatpush1.msra.mxu0 0.0
    %584 = vmatprep.subr.mxu0 0.0
    %585 = vmatpush1.msra.mxu0 0.0
    %586 = vmatprep.subr.mxu0 0.0
    %587 = vmatpush1.msra.mxu0 0.0
    %588 = vmatprep.mubr.f32.mxu0 0.0
    %589 = vmatmul.mubr.f32.gmra.mrb[0].mxu0 %v522
    %v590 = vpop.f32.mrb[0].mxu0
    %v591 = vadd.f32 %v519, %v590
    %v592 = vpop.f32.mrb[0].mxu0
    %593 = vdwg.mxu0
    %v594 = vmul.f32 %v591, 0.5
    %v595 = vtanh.pop %v594
    %v596 = vmul.f32 %v595, 0.5
    %v597 = vadd.f32 %v596, 0.5
    %598 = vst [vmem:[#allocation4] sm:$0xff] %v597
    // Predicated region
    $region58: #{tpu_custom_call.1} parent=1 // pred_check
      _
    $region59: #{tpu_custom_call.1} parent=1 // pred_check_branch
      %600 = sbr.rel (0) target = $region61
    $region60: #{tpu_custom_call.1} parent=1 // pred_region
      %s602 = ssub.s32 128, 128
      %603 = vsyncadd [#allocation3], %s602
      %s605 = sshll.u32 [#allocation2], 4
      %s606 = int_to_ptr.vmem [resolvable:$true] %s605
      %608 = dma.vmem_to_hbm [thread:$0]  %s606, 128, %s14, [#allocation3]
    $region61: #{tpu_custom_call.1} parent=1 // pred_fallthru
      _
    // Predicated region
    $region62: #{tpu_custom_call.1} parent=1 // pred_check
      _
    $region63: #{tpu_custom_call.1} parent=1 // pred_check_branch
      %610 = sbr.rel (0) target = $region65
    $region64: #{tpu_custom_call.1} parent=1 // pred_region
      %s612 = ssub.s32 128, 128
      %613 = vsyncadd [#allocation5], %s612
      %s615 = sshll.u32 [#allocation4], 4
      %s616 = int_to_ptr.vmem [resolvable:$true] %s615
      %618 = dma.vmem_to_hbm [thread:$0]  %s616, 128, %s15, [#allocation5]
    $region65: #{tpu_custom_call.1} parent=1 // pred_fallthru
      _
    // Predicated region
    $region66: #{tpu_custom_call.1} parent=1 // pred_check
      _
    $region67: #{tpu_custom_call.1} parent=1 // pred_check_branch
      %620 = sbr.rel (0) target = $region69
    $region68: #{tpu_custom_call.1} parent=1 // pred_region
      %621 = dma.done [#allocation3], 128
    $region69: #{tpu_custom_call.1} parent=1 // pred_fallthru
      _
    // Predicated region
    $region70: #{tpu_custom_call.1} parent=1 // pred_check
      _
    $region71: #{tpu_custom_call.1} parent=1 // pred_check_branch
      %623 = sbr.rel (0) target = $region73
    $region72: #{tpu_custom_call.1} parent=1 // pred_region
      %624 = dma.done [#allocation5], 128
    $region73: #{tpu_custom_call.1} parent=1 // pred_fallthru
      _
    %625 = vsyncpa [#allocation3], 1
    %626 = vsyncpa [#allocation5], 1

</llo_original>
